<compile_context>
chip_gen: v7x
topology: tpu7x:2x2x1
jax: 0.10.0
libtpu: 0.0.40
codegen_flags: <defaults>
</compile_context>

<pallas_src>
import functools
from typing import NamedTuple

import jax
import jax.numpy as jnp
from jax.experimental import pallas as pl
from jax.experimental.pallas import tpu as pltpu

_LANE = 128


class CALTables(NamedTuple):
    t_bm: jax.Array    # (N, C*C)  batch-major T_mat (default bf16)
    tt_bm: jax.Array   # (N, C*C)  batch-major T_mat_true
    cnt_tab: jax.Array  # (2C, N)  f32 counts: rows [:C] distill, [C:] true


def prepare_cal_tables(T_mat, T_mat_true, table_dtype=jnp.bfloat16):
    """One-time re-layout of the module 'parameters' (mirrors __init__).

    * counts are computed from the original full-precision values so the
      `T > 0` indicator is unchanged by bf16 storage.
    * the transition tensors are stored batch-major (N, C*C) so the per-step
      raw_idx gather is a contiguous row gather.
    """
    C, C2, N = T_mat.shape
    assert C == C2
    cnt = jnp.sum(T_mat > 0.0, axis=1).astype(jnp.float32)             # (C, N)
    cnt_true = jnp.sum(T_mat_true > 0.0, axis=1).astype(jnp.float32)   # (C, N)
    cnt_tab = jnp.concatenate([cnt, cnt_true], axis=0)                 # (2C, N)
    t_bm = jnp.transpose(T_mat, (2, 0, 1)).reshape(N, C * C).astype(table_dtype)
    tt_bm = jnp.transpose(T_mat_true, (2, 0, 1)).reshape(N, C * C).astype(table_dtype)
    return CALTables(t_bm, tt_bm, cnt_tab)


def _cal_kernel(cnt_ref, out_t_ref, t_ref, tt_ref, lma_ref,
                rec_ref, num_ref, *, eps):
    b = pl.program_id(1)
    C = lma_ref.shape[0]
    tb = t_ref.shape[0]

    @pl.when(b == 0)
    def _init():
        rec_ref[...] = jnp.zeros_like(rec_ref)
        num_ref[...] = jnp.zeros_like(num_ref)

    # ---- -log(softmax(outputs) + eps); classes on sublanes, batch on lanes ----
    x = out_t_ref[...]                                        # (C, TB) f32
    x = x - jnp.max(x, axis=0, keepdims=True)
    e = jnp.exp(x)
    inv = pl.reciprocal(jnp.sum(e, axis=0, keepdims=True), approx=False)
    L = -jnp.log(e * inv + eps)                               # (C, TB)

    cnt = cnt_ref[...]                                        # (2C, TB); pad cols are 0
    # Fused MXU contraction over the batch lane axis (distill + true in one dot):
    #   rec_both[i, j] += sum_b cnt[i, b] * L[j, b]
    rec_ref[...] += jax.lax.dot_general(
        cnt, L, (((1,), (1,)), ((), ())),
        preferred_element_type=jnp.float32)

    # diff[i, j, b] = L[j, b] - loss_mean_all[i, j]
    diff = L[None, :, :] - lma_ref[...][:, :, None]           # (C, C, TB) f32

    # Gathered slabs arrive batch-major (TB, C*C); swap to (C*C, TB) in VMEM
    # (XLU slot, hidden behind the VPU/HBM critical path) instead of burning an
    # extra HBM round trip in the wrapper.  The upcast-before-transpose keeps
    # the transpose on the well-supported 32-bit path; the leading-dim split
    # (C*C, TB) -> (C, C, TB) is layout-free.
    T = jnp.transpose(t_ref[...].astype(jnp.float32)).reshape(C, C, tb)
    Tt = jnp.transpose(tt_ref[...].astype(jnp.float32)).reshape(C, C, tb)
    E = jnp.sum(T * diff, axis=1)                             # (C, TB)
    Et = jnp.sum(Tt * diff, axis=1)                           # (C, TB)

    n_d = jnp.sum(cnt[:C] * E, axis=1, keepdims=True)         # (C, 1)
    n_t = jnp.sum(cnt[C:] * Et, axis=1, keepdims=True)        # (C, 1)
    num_ref[...] += jnp.concatenate([n_d, n_t], axis=0)       # (2C, 1)


def _vmem_capacity_bytes():
    try:
        info = pltpu.get_tpu_info()
        cap = getattr(info, "vmem_capacity_bytes", None)
        if cap:
            return int(cap)
    except Exception:
        pass
    return 64 * 1024 * 1024  # conservative (v7x-sized) fallback


def _choose_batch_tile(C, B, table_bytes, vmem_cap):
    """Largest lane-multiple batch tile whose working set fits comfortably.

    Per batch column: two table tensors x two pipeline buffers of C*C*table_bytes
    input, plus ~5 live (C*C)-column f32 transients (diff, upcast/transposed slab,
    product of the active branch) and small per-class vectors.
    """
    per_col = (4 * table_bytes + 20) * C * C + 64 * C + 512
    budget = int(vmem_cap * 0.7)
    tb = (budget // per_col) // _LANE * _LANE
    tb = max(_LANE, min(tb, 2048))
    b_ceil = -(-B // _LANE) * _LANE
    return int(min(tb, b_ceil))


def cross_entropy_stable_cal_multiple(outputs, raw_idx, loss_mean_all,
                                      tables, P_y_distill, eps=1e-5,
                                      batch_tile=None):
    """Pallas implementation of CrossEntropyStableCALMultiple.forward
    (the T_mat_true branch).  `tables` comes from prepare_cal_tables (the
    analogue of the module __init__)."""
    C = loss_mean_all.shape[0]
    B = outputs.shape[0]
    t_bm, tt_bm, cnt_tab = tables
    table_bytes = t_bm.dtype.itemsize

    # --- chip-aware batch tiling ------------------------------------------
    vmem_cap = _vmem_capacity_bytes()
    if batch_tile is None:
        tb = _choose_batch_tile(C, B, table_bytes, vmem_cap)
    else:
        tb = max(_LANE, (int(batch_tile) // _LANE) * _LANE)
    n_tiles = -(-B // tb)
    # TODO(synk): query the actual TensorCore count; 2 matches v7x and costs one
    # extra (fully masked / trivial) sweep on single-core v5e/v6e parts.
    n_par = 2 if n_tiles >= 2 else 1
    nb = -(-n_tiles // n_par)
    b_pad = n_par * nb * tb
    pad = b_pad - B

    # --- cheap layout glue (only small arrays are padded; the big tables are
    #     gathered contiguously and never padded or copied) ------------------
    # TODO(synk): for C*C*dtype >= ~4 KiB, fuse this gather into the kernel via
    # scalar-prefetched raw_idx + per-element pltpu.make_async_copy from an
    # HBM-resident (N, C*C) table to remove the remaining round trip.
    idx = raw_idx.astype(jnp.int32)
    if pad:
        idx = jnp.pad(idx, (0, pad))                   # pads with index 0 (valid)
    t_sel = jnp.take(t_bm, idx, axis=0)                # (b_pad, C*C) contiguous rows
    tt_sel = jnp.take(tt_bm, idx, axis=0)              # (b_pad, C*C)
    cnt_sel = jnp.take(cnt_tab, idx, axis=1)           # (2C, b_pad) f32
    if pad:
        # Every contribution of a padded column is gated by these counts, so
        # zeroing them makes the padding contribute exactly zero everywhere.
        col = jnp.arange(b_pad, dtype=jnp.int32)[None, :]
        cnt_sel = jnp.where(col < B, cnt_sel, 0.0)
    outputs_t = jnp.transpose(outputs.astype(jnp.float32))   # (C, B)
    if pad:
        outputs_t = jnp.pad(outputs_t, ((0, 0), (0, pad)))
    lma = loss_mean_all.astype(jnp.float32)

    kernel = functools.partial(_cal_kernel, eps=float(eps))

    grid_spec = pltpu.PrefetchScalarGridSpec(
        num_scalar_prefetch=0,
        grid=(n_par, nb),
        in_specs=[
            pl.BlockSpec((2 * C, tb), lambda p, b: (0, p * nb + b)),     # counts
            pl.BlockSpec((C, tb), lambda p, b: (0, p * nb + b)),         # logits^T
            pl.BlockSpec((tb, C * C), lambda p, b: (p * nb + b, 0)),     # T slabs
            pl.BlockSpec((tb, C * C), lambda p, b: (p * nb + b, 0)),     # T_true slabs
            pl.BlockSpec((C, C), lambda p, b: (0, 0)),                   # loss_mean_all
        ],
        out_specs=(
            pl.BlockSpec((None, 2 * C, C), lambda p, b: (p, 0, 0)),      # rec partials
            pl.BlockSpec((None, 2 * C, 1), lambda p, b: (p, 0, 0)),      # numerator partials
        ),
    )

    out_shape = (
        jax.ShapeDtypeStruct((n_par, 2 * C, C), jnp.float32),
        jax.ShapeDtypeStruct((n_par, 2 * C, 1), jnp.float32),
    )

    rec_parts, num_parts = pl.pallas_call(
        kernel,
        out_shape=out_shape,
        grid_spec=grid_spec,
        compiler_params=pltpu.CompilerParams(
            dimension_semantics=("parallel", "arbitrary"),
            vmem_limit_bytes=int(vmem_cap * 0.9),
        ),
    )(cnt_sel, outputs_t, t_sel, tt_sel, lma)

    # --- tiny O(C^2) finalize in the wrapper --------------------------------
    rec_both = jnp.sum(rec_parts, axis=0)              # (2C, C)
    num = jnp.sum(num_parts, axis=0)[:, 0]             # (2C,)
    den = jnp.sum(cnt_sel, axis=1)                     # (2C,) == ind_sum (j-independent)
    den = jnp.where(den == 0.0, 1.0, den)
    per_class = num / den
    pyd = P_y_distill.reshape(-1).astype(jnp.float32)
    loss_out = jnp.sum(per_class[:C] * pyd)
    loss_out_true = jnp.sum(per_class[C:]) * (1.0 / C)
    return loss_out, loss_out_true, rec_both[:C], rec_both[C:]


def _reference(outputs, raw_idx, loss_mean_all, T_mat, T_mat_true, P_y_distill, eps=1e-5):
    """Pure-JAX port of the PyTorch forward, for correctness checking."""
    log_out = -jnp.log(jax.nn.softmax(outputs, axis=-1) + eps)           # (B, C)
    T = T_mat[:, :, raw_idx]
    Tt = T_mat_true[:, :, raw_idx]
    C, _, B = T.shape
    ind = jnp.broadcast_to(jnp.sum((T > 0.0).astype(jnp.float32), axis=1)[:, None, :], (C, C, B))
    ind_t = jnp.broadcast_to(jnp.sum((Tt > 0.0).astype(jnp.float32), axis=1)[:, None, :], (C, C, B))
    loss_all = jnp.broadcast_to(log_out.T[None, :, :], (C, C, B))
    norm = (loss_all - loss_mean_all[:, :, None]) * ind
    norm_t = (loss_all - loss_mean_all[:, :, None]) * ind_t
    rec = jnp.sum(ind * loss_all, axis=2)
    rec_t = jnp.sum(ind_t * loss_all, axis=2)
    ind_sum = jnp.where(jnp.sum(ind, axis=2) == 0.0, 1.0, jnp.sum(ind, axis=2))
    ind_t_sum = jnp.where(jnp.sum(ind_t, axis=2) == 0.0, 1.0, jnp.sum(ind_t, axis=2))
    loss_out = jnp.sum(jnp.sum(jnp.sum(T * norm, axis=2) / ind_sum, axis=1) * P_y_distill)
    loss_out_true = jnp.sum(jnp.sum(jnp.sum(Tt * norm_t, axis=2) / ind_t_sum, axis=1) * (1.0 / C))
    return loss_out, loss_out_true, rec, rec_t


def _run_case(key, C, B, N, batch_tile=None):
    k_out, k_t, k_tt, k_idx, k_lma, k_py = jax.random.split(key, 6)
    outputs = jax.random.normal(k_out, (B, C), dtype=jnp.float32)
    u = jax.random.uniform(k_t, (C, C, N), dtype=jnp.float32)
    T_mat = jnp.where(u > 0.3, u, 0.0)                 # sparse-ish, exercises >0 indicator
    v = jax.random.uniform(k_tt, (C, C, N), dtype=jnp.float32)
    T_mat_true = jnp.where(v > 0.5, v, 0.0)
    p = jax.random.uniform(k_py, (C,), dtype=jnp.float32) + 0.1
    P_y_distill = p / jnp.sum(p)
    raw_idx = jax.random.randint(k_idx, (B,), 0, N, dtype=jnp.int32)
    loss_mean_all = jax.random.normal(k_lma, (C, C), dtype=jnp.float32)

    # One-time table preparation (the analogue of the PyTorch module __init__).
    tables = prepare_cal_tables(T_mat, T_mat_true)

    fwd = jax.jit(functools.partial(cross_entropy_stable_cal_multiple,
                                    batch_tile=batch_tile))
    out = fwd(outputs, raw_idx, loss_mean_all, tables, P_y_distill)
    loss_out, loss_out_true, rec, rec_true = jax.block_until_ready(out)

    # The reference sees the same bf16-rounded transition values the kernel
    # streams (storage precision is a documented design choice); the >0
    # indicator is unaffected because no positive entry underflows in bf16.
    T_r = T_mat.astype(jnp.bfloat16).astype(jnp.float32)
    Tt_r = T_mat_true.astype(jnp.bfloat16).astype(jnp.float32)
    r_loss, r_loss_true, r_rec, r_rec_true = _reference(
        outputs, raw_idx, loss_mean_all, T_r, Tt_r, P_y_distill)

    assert jnp.allclose(loss_out, r_loss, atol=1e-3, rtol=1e-3), (loss_out, r_loss)
    assert jnp.allclose(loss_out_true, r_loss_true, atol=1e-3, rtol=1e-3), (loss_out_true, r_loss_true)
    assert jnp.allclose(rec, r_rec, atol=1e-2, rtol=1e-2)
    assert jnp.allclose(rec_true, r_rec_true, atol=1e-2, rtol=1e-2)


if __name__ == "__main__":
    # Unused-by-forward arguments of the PyTorch signature (true_y, distill_y,
    # loss_mean_y/n[_true], loss_mean_all_true, distilled_weights) are omitted.
    key = jax.random.PRNGKey(0)
    k1, k2 = jax.random.split(key)
    # Small smoke test: single batch tile, single core-chunk.
    _run_case(k1, C=4, B=8, N=32)
    # Larger case: multiple batch tiles, both parallel core-chunks, ragged tail.
    _run_case(k2, C=10, B=300, N=500, batch_tile=128)
    print("KERNEL_OK")
</pallas_src>

<mosaic_0001>
module attributes {stable_mosaic.version = 11 : i64} {
  func.func @_cal_kernel(%arg0: i32, %arg1: i32, %arg2: memref<8x128xf32, #tpu.memory_space<vmem>>, %arg3: memref<4x128xf32, #tpu.memory_space<vmem>>, %arg4: memref<128x16xbf16, #tpu.memory_space<vmem>>, %arg5: memref<128x16xbf16, #tpu.memory_space<vmem>>, %arg6: memref<4x4xf32, #tpu.memory_space<vmem>>, %arg7: memref<1x8x4xf32, #tpu.memory_space<vmem>>, %arg8: memref<1x8x1xf32, #tpu.memory_space<vmem>>) attributes {dimension_semantics = [#tpu.dimension_semantics<parallel>, #tpu.dimension_semantics<arbitrary>], iteration_bounds = array<i64: 1, 1>, scalar_prefetch = 0 : i64, scratch_operands = 0 : i64, tpu.core_type = #tpu.core_type<tc>, window_params = [{transform_indices = @transform_0, window_bounds = array<i64: 8, 128>}, {transform_indices = @transform_1, window_bounds = array<i64: 4, 128>}, {transform_indices = @transform_2, window_bounds = array<i64: 128, 16>}, {transform_indices = @transform_3, window_bounds = array<i64: 128, 16>}, {pipeline_mode = #tpu.pipeline_mode<synchronous>, transform_indices = @transform_4, window_bounds = array<i64: 4, 4>}, {transform_indices = @transform_5, window_bounds = array<i64: 1, 8, 4>}, {transform_indices = @transform_6, window_bounds = array<i64: 1, 8, 1>}]} {
    %c0_i32 = arith.constant 0 : i32
    %0 = arith.cmpi eq, %arg1, %c0_i32 : i32
    %1 = arith.extui %0 : i1 to i32
    %c0_i32_0 = arith.constant 0 : i32
    %2 = arith.cmpi ne, %1, %c0_i32_0 : i32
    scf.if %2 {
      %cst_30 = arith.constant 0.000000e+00 : f32
      %60 = vector.broadcast %cst_30 : f32 to vector<8x4xf32>
      %c0_31 = arith.constant 0 : index
      %c0_32 = arith.constant 0 : index
      %c0_33 = arith.constant 0 : index
      %61 = vector.load %arg7[%c0_31, %c0_32, %c0_33] : memref<1x8x4xf32, #tpu.memory_space<vmem>>, vector<1x8x4xf32>
      %62 = vector.shape_cast %61 : vector<1x8x4xf32> to vector<8x4xf32>
      %63 = vector.shape_cast %60 : vector<8x4xf32> to vector<1x8x4xf32>
      tpu.vector_store %arg7[%c0_31, %c0_32, %c0_33], %63 {strides = array<i32>} : memref<1x8x4xf32, #tpu.memory_space<vmem>>, vector<1x8x4xf32>,
      %cst_34 = arith.constant 0.000000e+00 : f32
      %64 = vector.broadcast %cst_34 : f32 to vector<8x1xf32>
      %c0_35 = arith.constant 0 : index
      %c0_36 = arith.constant 0 : index
      %c0_37 = arith.constant 0 : index
      %65 = vector.load %arg8[%c0_35, %c0_36, %c0_37] : memref<1x8x1xf32, #tpu.memory_space<vmem>>, vector<1x8x1xf32>
      %66 = vector.shape_cast %65 : vector<1x8x1xf32> to vector<8x1xf32>
      %67 = vector.shape_cast %64 : vector<8x1xf32> to vector<1x8x1xf32>
      tpu.vector_store %arg8[%c0_35, %c0_36, %c0_37], %67 {strides = array<i32>} : memref<1x8x1xf32, #tpu.memory_space<vmem>>, vector<1x8x1xf32>,
    } else {
    }
    %c0 = arith.constant 0 : index
    %c0_1 = arith.constant 0 : index
    %3 = vector.load %arg3[%c0, %c0_1] : memref<4x128xf32, #tpu.memory_space<vmem>>, vector<4x128xf32>
    %cst = arith.constant dense<0xFF800000> : vector<128xf32>
    %4 = vector.multi_reduction <maximumf>, %3, %cst [0] : vector<4x128xf32> to vector<128xf32>
    %5 = vector.shape_cast %4 : vector<128xf32> to vector<1x128xf32>
    %6 = vector.broadcast %5 : vector<1x128xf32> to vector<4x128xf32>
    %7 = arith.subf %3, %6 : vector<4x128xf32>
    %8 = math.exp %7 : vector<4x128xf32>
    %cst_2 = arith.constant dense<0.000000e+00> : vector<128xf32>
    %9 = vector.multi_reduction <add>, %8, %cst_2 [0] : vector<4x128xf32> to vector<128xf32>
    %10 = vector.shape_cast %9 : vector<128xf32> to vector<1x128xf32>
    %11 = tpu.reciprocal %10 : vector<1x128xf32> -> vector<1x128xf32>
    %12 = vector.broadcast %11 : vector<1x128xf32> to vector<4x128xf32>
    %13 = arith.mulf %8, %12 : vector<4x128xf32>
    %cst_3 = arith.constant 9.99999974E-6 : f32
    %14 = vector.broadcast %cst_3 : f32 to vector<4x128xf32>
    %15 = arith.addf %13, %14 : vector<4x128xf32>
    %16 = math.log %15 : vector<4x128xf32>
    %cst_4 = arith.constant 0.000000e+00 : f32
    %17 = vector.broadcast %cst_4 : f32 to vector<4x128xf32>
    %18 = arith.subf %17, %16 : vector<4x128xf32>
    %c0_5 = arith.constant 0 : index
    %c0_6 = arith.constant 0 : index
    %19 = vector.load %arg2[%c0_5, %c0_6] : memref<8x128xf32, #tpu.memory_space<vmem>>, vector<8x128xf32>
    %c0_7 = arith.constant 0 : index
    %c0_8 = arith.constant 0 : index
    %c0_9 = arith.constant 0 : index
    %20 = vector.load %arg7[%c0_7, %c0_8, %c0_9] : memref<1x8x4xf32, #tpu.memory_space<vmem>>, vector<1x8x4xf32>
    %21 = vector.shape_cast %20 : vector<1x8x4xf32> to vector<8x4xf32>
    %cst_10 = arith.constant dense<0.000000e+00> : vector<8x4xf32>
    %22 = tpu.matmul %19, %18, %cst_10 {dimension_numbers = #tpu.dot_dimension_numbers<[1], [1], [0], [0], [0, 0, 1, 0], [], []>} : vector<8x128xf32>, vector<4x128xf32>, vector<8x4xf32> -> vector<8x4xf32>
    %23 = arith.addf %21, %22 : vector<8x4xf32>
    %c0_11 = arith.constant 0 : index
    %c0_12 = arith.constant 0 : index
    %c0_13 = arith.constant 0 : index
    %24 = vector.load %arg7[%c0_11, %c0_12, %c0_13] : memref<1x8x4xf32, #tpu.memory_space<vmem>>, vector<1x8x4xf32>
    %25 = vector.shape_cast %24 : vector<1x8x4xf32> to vector<8x4xf32>
    %26 = vector.shape_cast %23 : vector<8x4xf32> to vector<1x8x4xf32>
    tpu.vector_store %arg7[%c0_11, %c0_12, %c0_13], %26 {strides = array<i32>} : memref<1x8x4xf32, #tpu.memory_space<vmem>>, vector<1x8x4xf32>,
    %27 = vector.shape_cast %18 : vector<4x128xf32> to vector<1x4x128xf32>
    %c0_14 = arith.constant 0 : index
    %c0_15 = arith.constant 0 : index
    %28 = vector.load %arg6[%c0_14, %c0_15] : memref<4x4xf32, #tpu.memory_space<vmem>>, vector<4x4xf32>
    %29 = vector.shape_cast %28 : vector<4x4xf32> to vector<4x4x1xf32>
    %30 = vector.broadcast %27 : vector<1x4x128xf32> to vector<4x4x128xf32>
    %31 = vector.broadcast %29 : vector<4x4x1xf32> to vector<4x4x128xf32>
    %32 = arith.subf %30, %31 : vector<4x4x128xf32>
    %c0_16 = arith.constant 0 : index
    %c0_17 = arith.constant 0 : index
    %33 = vector.load %arg4[%c0_16, %c0_17] : memref<128x16xbf16, #tpu.memory_space<vmem>>, vector<128x16xbf16>
    %34 = arith.extf %33 : vector<128x16xbf16> to vector<128x16xf32>
    %35 = tpu.transpose %34, [1, 0] : vector<128x16xf32> -> vector<16x128xf32>
    %36 = vector.shape_cast %35 : vector<16x128xf32> to vector<4x4x128xf32>
    %c0_18 = arith.constant 0 : index
    %c0_19 = arith.constant 0 : index
    %37 = vector.load %arg5[%c0_18, %c0_19] : memref<128x16xbf16, #tpu.memory_space<vmem>>, vector<128x16xbf16>
    %38 = arith.extf %37 : vector<128x16xbf16> to vector<128x16xf32>
    %39 = tpu.transpose %38, [1, 0] : vector<128x16xf32> -> vector<16x128xf32>
    %40 = vector.shape_cast %39 : vector<16x128xf32> to vector<4x4x128xf32>
    %41 = arith.mulf %36, %32 : vector<4x4x128xf32>
    %cst_20 = arith.constant dense<0.000000e+00> : vector<4x128xf32>
    %42 = vector.multi_reduction <add>, %41, %cst_20 [1] : vector<4x4x128xf32> to vector<4x128xf32>
    %43 = arith.mulf %40, %32 : vector<4x4x128xf32>
    %cst_21 = arith.constant dense<0.000000e+00> : vector<4x128xf32>
    %44 = vector.multi_reduction <add>, %43, %cst_21 [1] : vector<4x4x128xf32> to vector<4x128xf32>
    %45 = vector.extract_strided_slice %19 {offsets = [0, 0], sizes = [4, 128], strides = [1, 1]} : vector<8x128xf32> to vector<4x128xf32>
    %46 = arith.mulf %45, %42 : vector<4x128xf32>
    %cst_22 = arith.constant dense<0.000000e+00> : vector<4xf32>
    %47 = vector.multi_reduction <add>, %46, %cst_22 [1] : vector<4x128xf32> to vector<4xf32>
    %48 = vector.shape_cast %47 : vector<4xf32> to vector<4x1xf32>
    %49 = vector.extract_strided_slice %19 {offsets = [4, 0], sizes = [4, 128], strides = [1, 1]} : vector<8x128xf32> to vector<4x128xf32>
    %50 = arith.mulf %49, %44 : vector<4x128xf32>
    %cst_23 = arith.constant dense<0.000000e+00> : vector<4xf32>
    %51 = vector.multi_reduction <add>, %50, %cst_23 [1] : vector<4x128xf32> to vector<4xf32>
    %52 = vector.shape_cast %51 : vector<4xf32> to vector<4x1xf32>
    %c0_24 = arith.constant 0 : index
    %c0_25 = arith.constant 0 : index
    %c0_26 = arith.constant 0 : index
    %53 = vector.load %arg8[%c0_24, %c0_25, %c0_26] : memref<1x8x1xf32, #tpu.memory_space<vmem>>, vector<1x8x1xf32>
    %54 = vector.shape_cast %53 : vector<1x8x1xf32> to vector<8x1xf32>
    %55 = tpu.concatenate %48, %52 in 0 : vector<4x1xf32>, vector<4x1xf32> -> vector<8x1xf32>
    %56 = arith.addf %54, %55 : vector<8x1xf32>
    %c0_27 = arith.constant 0 : index
    %c0_28 = arith.constant 0 : index
    %c0_29 = arith.constant 0 : index
    %57 = vector.load %arg8[%c0_27, %c0_28, %c0_29] : memref<1x8x1xf32, #tpu.memory_space<vmem>>, vector<1x8x1xf32>
    %58 = vector.shape_cast %57 : vector<1x8x1xf32> to vector<8x1xf32>
    %59 = vector.shape_cast %56 : vector<8x1xf32> to vector<1x8x1xf32>
    tpu.vector_store %arg8[%c0_27, %c0_28, %c0_29], %59 {strides = array<i32>} : memref<1x8x1xf32, #tpu.memory_space<vmem>>, vector<1x8x1xf32>,
    return
  }
  func.func @transform_0(%arg0: i32, %arg1: i32) -> (i32, i32) {
    %c1_i32 = arith.constant 1 : i32
    %0 = arith.muli %arg0, %c1_i32 : i32
    %1 = arith.addi %0, %arg1 : i32
    %c0_i32 = arith.constant 0 : i32
    %c0_i32_0 = arith.constant 0 : i32
    return %c0_i32, %1 : i32, i32
  }
  func.func @transform_1(%arg0: i32, %arg1: i32) -> (i32, i32) {
    %c1_i32 = arith.constant 1 : i32
    %0 = arith.muli %arg0, %c1_i32 : i32
    %1 = arith.addi %0, %arg1 : i32
    %c0_i32 = arith.constant 0 : i32
    %c0_i32_0 = arith.constant 0 : i32
    return %c0_i32, %1 : i32, i32
  }
  func.func @transform_2(%arg0: i32, %arg1: i32) -> (i32, i32) {
    %c1_i32 = arith.constant 1 : i32
    %0 = arith.muli %arg0, %c1_i32 : i32
    %1 = arith.addi %0, %arg1 : i32
    %c0_i32 = arith.constant 0 : i32
    %c0_i32_0 = arith.constant 0 : i32
    return %1, %c0_i32 : i32, i32
  }
  func.func @transform_3(%arg0: i32, %arg1: i32) -> (i32, i32) {
    %c1_i32 = arith.constant 1 : i32
    %0 = arith.muli %arg0, %c1_i32 : i32
    %1 = arith.addi %0, %arg1 : i32
    %c0_i32 = arith.constant 0 : i32
    %c0_i32_0 = arith.constant 0 : i32
    return %1, %c0_i32 : i32, i32
  }
  func.func @transform_4(%arg0: i32, %arg1: i32) -> (i32, i32) {
    %c0_i32 = arith.constant 0 : i32
    %c0_i32_0 = arith.constant 0 : i32
    %c0_i32_1 = arith.constant 0 : i32
    return %c0_i32, %c0_i32_0 : i32, i32
  }
  func.func @transform_5(%arg0: i32, %arg1: i32) -> (i32, i32, i32) {
    %c0_i32 = arith.constant 0 : i32
    %c0_i32_0 = arith.constant 0 : i32
    %c0_i32_1 = arith.constant 0 : i32
    return %arg0, %c0_i32, %c0_i32_0 : i32, i32, i32
  }
  func.func @transform_6(%arg0: i32, %arg1: i32) -> (i32, i32, i32) {
    %c0_i32 = arith.constant 0 : i32
    %c0_i32_0 = arith.constant 0 : i32
    %c0_i32_1 = arith.constant 0 : i32
    return %arg0, %c0_i32, %c0_i32_0 : i32, i32, i32
  }
}

</mosaic_0001>

<llo_original>
// kernel: cross_entropy_stable_cal_multiple.1
$region0: #{cross_entropy_stable_cal_multiple.1}
  #allocation0 [shape = 'u32[]', space=smem, size = 0x4, offset = 0x4, fixed_abs, tag = 'smem constant byte address 0x4 - core index']
  #allocation1 [shape = 'u32[144,128]{1,0:T(1,128)}', space=vmem, size = 0x12000, scoped, tag = 'internal scratch']
  %s0 = inlined_call_operand.vmem [shape: f32[8,128], index: 0, kind: input, shape index: {}]
  %s1 = inlined_call_operand.vmem [shape: f32[4,128], index: 1, kind: input, shape index: {}]
  %s2 = inlined_call_operand.vmem [shape: bf16[128,16], index: 2, kind: input, shape index: {}]
  %s3 = inlined_call_operand.vmem [shape: bf16[128,16], index: 3, kind: input, shape index: {}]
  %s4 = inlined_call_operand.vmem [shape: f32[4,4], index: 4, kind: input, shape index: {}]
  %s5 = inlined_call_operand.vmem [shape: f32[1,8,4], index: 5, kind: output, shape index: {0}]
  %s6 = inlined_call_operand.vmem [shape: f32[1,8,1], index: 6, kind: output, shape index: {1}]
  %7 = xla_tuple %s5, %s6
  %s8 = sld [smem:[#allocation0]]
  $region42: #{cross_entropy_stable_cal_multiple.1} parent=0
    _
  %s10 = ssub.s32 1, %s8
  %s11 = scalar_select 0, %s10, %s8
  // Predicated region
  $region2: #{cross_entropy_stable_cal_multiple.1} parent=0 // pred_check
    _
  $region3: #{cross_entropy_stable_cal_multiple.1} parent=0 // pred_check_branch
    %13 = sbr.rel (0) target = $region5
  $region4: #{cross_entropy_stable_cal_multiple.1} parent=0 // pred_region
    %s14 = sadd.s32 0, 0
    %p15 = scmp.lt.s32.totalorder %s14, 0
    %s16 = scalar_select %p15, %s14, 0
    %s17 = smul.addr %s16, 8
    %s18 = scalar_lea.vmem %s0, %s17
    %s19 = sadd.s32 0, 0
  $region5: #{cross_entropy_stable_cal_multiple.1} parent=0 // pred_fallthru
    _
  // Predicated region
  $region6: #{cross_entropy_stable_cal_multiple.1} parent=0 // pred_check
    _
  $region7: #{cross_entropy_stable_cal_multiple.1} parent=0 // pred_check_branch
    %21 = sbr.rel (0) target = $region9
  $region8: #{cross_entropy_stable_cal_multiple.1} parent=0 // pred_region
    %s22 = sadd.s32 0, 0
    %p23 = scmp.lt.s32.totalorder %s22, 0
    %s24 = scalar_select %p23, %s22, 0
    %s25 = smul.addr %s24, 4
    %s26 = scalar_lea.vmem %s1, %s25
    %s27 = sadd.s32 0, 0
  $region9: #{cross_entropy_stable_cal_multiple.1} parent=0 // pred_fallthru
    _
  // Predicated region
  $region10: #{cross_entropy_stable_cal_multiple.1} parent=0 // pred_check
    _
  $region11: #{cross_entropy_stable_cal_multiple.1} parent=0 // pred_check_branch
    %29 = sbr.rel (0) target = $region13
  $region12: #{cross_entropy_stable_cal_multiple.1} parent=0 // pred_region
    %s30 = sadd.s32 0, 0
    %s31 = smul.u32 16, %s30
    %p32 = scmp.lt.s32.totalorder %s31, 15
    %s33 = scalar_select %p32, %s31, 15
    %s34 = smul.addr %s33, 4
    %s35 = scalar_lea.vmem %s2, %s34
    %s36 = sadd.s32 0, 0
    %s37 = smul.u32 16, %s36
  $region13: #{cross_entropy_stable_cal_multiple.1} parent=0 // pred_fallthru
    _
  // Predicated region
  $region14: #{cross_entropy_stable_cal_multiple.1} parent=0 // pred_check
    _
  $region15: #{cross_entropy_stable_cal_multiple.1} parent=0 // pred_check_branch
    %39 = sbr.rel (0) target = $region17
  $region16: #{cross_entropy_stable_cal_multiple.1} parent=0 // pred_region
    %s40 = sadd.s32 0, 0
    %s41 = smul.u32 16, %s40
    %p42 = scmp.lt.s32.totalorder %s41, 15
    %s43 = scalar_select %p42, %s41, 15
    %s44 = smul.addr %s43, 4
    %s45 = scalar_lea.vmem %s3, %s44
    %s46 = sadd.s32 0, 0
    %s47 = smul.u32 16, %s46
  $region17: #{cross_entropy_stable_cal_multiple.1} parent=0 // pred_fallthru
    _
  // Predicated region
  $region18: #{cross_entropy_stable_cal_multiple.1} parent=0 // pred_check
    _
  $region19: #{cross_entropy_stable_cal_multiple.1} parent=0 // pred_check_branch
    %49 = sbr.rel (0) target = $region21
  $region20: #{cross_entropy_stable_cal_multiple.1} parent=0 // pred_region
    _
  $region21: #{cross_entropy_stable_cal_multiple.1} parent=0 // pred_fallthru
    _
  %s50 = sadd.s32 0, 0
  %p51 = scmp.lt.s32.totalorder %s50, 0
  %s52 = scalar_select %p51, %s50, 0
  %s53 = smul.addr %s52, 8
  %s54 = scalar_lea.vmem %s0, %s53
  %s55 = sadd.s32 0, 0
  %p56 = scmp.lt.s32.totalorder %s55, 0
  %s57 = scalar_select %p56, %s55, 0
  %s58 = smul.addr %s57, 4
  %s59 = scalar_lea.vmem %s1, %s58
  %s60 = sadd.s32 0, 0
  %s61 = smul.u32 16, %s60
  %p62 = scmp.lt.s32.totalorder %s61, 15
  %s63 = scalar_select %p62, %s61, 15
  %s64 = smul.addr %s63, 4
  %s65 = scalar_lea.vmem %s2, %s64
  %s66 = sadd.s32 0, 0
  %s67 = smul.u32 16, %s66
  %p68 = scmp.lt.s32.totalorder %s67, 15
  %s69 = scalar_select %p68, %s67, 15
  %s70 = smul.addr %s69, 4
  %s71 = scalar_lea.vmem %s3, %s70
  %s72 = sadd.s32 0, 0
  %p73 = scmp.lt.s32.totalorder %s72, 0
  %s74 = scalar_select %p73, %s72, 0
  %s75 = smul.addr %s74, 8
  %s76 = scalar_lea.vmem %s0, %s75
  %s77 = sadd.s32 0, 0
  %s78 = sadd.s32 0, 0
  %p79 = scmp.lt.s32.totalorder %s78, 0
  %s80 = scalar_select %p79, %s78, 0
  %s81 = smul.addr %s80, 4
  %s82 = scalar_lea.vmem %s1, %s81
  %s83 = sadd.s32 0, 0
  %s84 = sadd.s32 0, 0
  %s85 = smul.u32 16, %s84
  %p86 = scmp.lt.s32.totalorder %s85, 15
  %s87 = scalar_select %p86, %s85, 15
  %s88 = smul.addr %s87, 4
  %s89 = scalar_lea.vmem %s2, %s88
  %s90 = sadd.s32 0, 0
  %s91 = smul.u32 16, %s90
  %s92 = sadd.s32 0, 0
  %s93 = smul.u32 16, %s92
  %p94 = scmp.lt.s32.totalorder %s93, 15
  %s95 = scalar_select %p94, %s93, 15
  %s96 = smul.addr %s95, 4
  %s97 = scalar_lea.vmem %s3, %s96
  %s98 = sadd.s32 0, 0
  %s99 = smul.u32 16, %s98
  %p100 = scmp.eq.s32.totalorder 0, 0
  // Predicated region
  $region22: #{cross_entropy_stable_cal_multiple.1} parent=0 // pred_check
    %p101 = pneg %p100
  $region23: #{cross_entropy_stable_cal_multiple.1} parent=0 // pred_check_branch
    %103 = sbr.rel (%p101) target = $region25
  $region24: #{cross_entropy_stable_cal_multiple.1} parent=0 // pred_region
    %vm104 = vcmask 31744
    %105 = vst.msk [vmem:[%s5] sm:$0xff] %vm104, 0.0
    %vm106 = vcmask 7168
    %107 = vst.msk [vmem:[%s6] sm:$0xff] %vm106, 0.0
  $region25: #{cross_entropy_stable_cal_multiple.1} parent=0 // pred_fallthru
    _
  %v108 = vld [vmem:[%s82] sm:$0xf]
  %vm109 = vcmask 1043456
  %v110 = vsel %vm109, %v108, -inf
  %v111 = vrot.slane %v110, 4
  %v112 = vmax.f32 %v110, %v111
  %v113 = vrot.slane %v112, 2
  %v114 = vmax.f32 %v112, %v113
  %v115 = vrot.slane %v114, 1
  %v116 = vmax.f32 %v114, %v115
  %v117 = vsub.f32 %v108, %v116
  %v118 = vmul.f32 %v117, 1.442695
  %v119 = vpow.pop %v118
  %v120 = vsel %vm109, %v119, 0.0
  %v121 = vrot.slane %v120, 4
  %v122 = vadd.f32 %v120, %v121
  %v123 = vrot.slane %v122, 2
  %v124 = vadd.f32 %v122, %v123
  %v125 = vrot.slane %v124, 1
  %v126 = vadd.f32 %v124, %v125
  %v127 = vrcp.pop %v126
  %v128 = vmul.f32 %v119, %v127
  %v129 = vadd.f32 %v128, 1e-05
  %v130 = vlog2.pop %v129
  %v131 = vmul.f32 %v130, 0.6931472
  %v132 = vsub.f32 0.0, %v131
  %v133 = vld [vmem:[%s76] sm:$0xff]
  %v134 = vld [vmem:[%s5] sm:$0xff]
  %135 = vmatprep.subr.mxu0 0.0
  %136 = vmatpush1.xpose.msra.mxu0 %v132
  %137 = vmatprep.subr.mxu0 0.0
  %138 = vmatpush1.xpose.msra.mxu0 0.0
  %139 = vmatprep.subr.mxu0 0.0
  %140 = vmatpush1.xpose.msra.mxu0 0.0
  %141 = vmatprep.subr.mxu0 0.0
  %142 = vmatpush1.xpose.msra.mxu0 0.0
  %143 = vmatprep.subr.mxu0 0.0
  %144 = vmatpush1.xpose.msra.mxu0 0.0
  %145 = vmatprep.subr.mxu0 0.0
  %146 = vmatpush1.xpose.msra.mxu0 0.0
  %147 = vmatprep.subr.mxu0 0.0
  %148 = vmatpush1.xpose.msra.mxu0 0.0
  %149 = vmatprep.subr.mxu0 0.0
  %150 = vmatpush1.xpose.msra.mxu0 0.0
  %151 = vmatprep.subr.mxu0 0.0
  %152 = vmatpush1.xpose.msra.mxu0 0.0
  %153 = vmatprep.subr.mxu0 0.0
  %154 = vmatpush1.xpose.msra.mxu0 0.0
  %155 = vmatprep.subr.mxu0 0.0
  %156 = vmatpush1.xpose.msra.mxu0 0.0
  %157 = vmatprep.subr.mxu0 0.0
  %158 = vmatpush1.xpose.msra.mxu0 0.0
  %159 = vmatprep.subr.mxu0 0.0
  %160 = vmatpush1.xpose.msra.mxu0 0.0
  %161 = vmatprep.subr.mxu0 0.0
  %162 = vmatpush1.xpose.msra.mxu0 0.0
  %163 = vmatprep.subr.mxu0 0.0
  %164 = vmatpush1.xpose.msra.mxu0 0.0
  %165 = vmatprep.subr.mxu0 0.0
  %166 = vmatpush1.xpose.msra.mxu0 0.0
  %167 = vmatprep.subr.mxu0 0.0
  %168 = vmatpush1.xpose.msra.mxu0 0.0
  %169 = vmatprep.subr.mxu0 0.0
  %170 = vmatpush1.xpose.msra.mxu0 0.0
  %171 = vmatprep.subr.mxu0 0.0
  %172 = vmatpush1.xpose.msra.mxu0 0.0
  %173 = vmatprep.subr.mxu0 0.0
  %174 = vmatpush1.xpose.msra.mxu0 0.0
  %175 = vmatprep.subr.mxu0 0.0
  %176 = vmatpush1.xpose.msra.mxu0 0.0
  %177 = vmatprep.subr.mxu0 0.0
  %178 = vmatpush1.xpose.msra.mxu0 0.0
  %179 = vmatprep.subr.mxu0 0.0
  %180 = vmatpush1.xpose.msra.mxu0 0.0
  %181 = vmatprep.subr.mxu0 0.0
  %182 = vmatpush1.xpose.msra.mxu0 0.0
  %183 = vmatprep.subr.mxu0 0.0
  %184 = vmatpush1.xpose.msra.mxu0 0.0
  %185 = vmatprep.subr.mxu0 0.0
  %186 = vmatpush1.xpose.msra.mxu0 0.0
  %187 = vmatprep.subr.mxu0 0.0
  %188 = vmatpush1.xpose.msra.mxu0 0.0
  %189 = vmatprep.subr.mxu0 0.0
  %190 = vmatpush1.xpose.msra.mxu0 0.0
  %191 = vmatprep.subr.mxu0 0.0
  %192 = vmatpush1.xpose.msra.mxu0 0.0
  %193 = vmatprep.subr.mxu0 0.0
  %194 = vmatpush1.xpose.msra.mxu0 0.0
  %195 = vmatprep.subr.mxu0 0.0
  %196 = vmatpush1.xpose.msra.mxu0 0.0
  %197 = vmatprep.subr.mxu0 0.0
  %198 = vmatpush1.xpose.msra.mxu0 0.0
  %199 = vmatprep.mubr.f32.mxu0 0.0
  %200 = vmatmul.mubr.f32.gmra.mrb[0].mxu0 %v133
  %v201 = vpop.f32.mrb[0].mxu0
  %v202 = vadd.f32 0.0, %v201
  %v203 = vpop.f32.mrb[0].mxu0
  %204 = vdwg.mxu0
  %v205 = vadd.f32 %v134, %v202
  %vm206 = vcmask 31744
  %207 = vst.msk [vmem:[%s5] sm:$0xff] %vm206, %v205
  %v208 = vld [vmem:[%s4] sm:$0xf]
  %v209 = vlaneseq
  %v210 = vshrl.u32 %v209, 7
  %v211 = vsub.s32 0, %v210
  %v212 = vrot.slane %v208, %v211
  %214 = vbcast.lane.b32.xlu0 %v212, 256
  %v215 = vpop.permute.xlu0 %214
  %v216 = vlaneseq
  %v217 = vshrl.u32 %v216, 7
  %v218 = vsub.s32 1, %v217
  %v219 = vrot.slane %v208, %v218
  %221 = vbcast.lane.b32.xlu0 %v219, 256
  %v222 = vpop.permute.xlu0 %221
  %v223 = vlaneseq
  %v224 = vshrl.u32 %v223, 7
  %v225 = vsub.s32 2, %v224
  %v226 = vrot.slane %v208, %v225
  %228 = vbcast.lane.b32.xlu0 %v226, 256
  %v229 = vpop.permute.xlu0 %228
  %v230 = vlaneseq
  %v231 = vshrl.u32 %v230, 7
  %v232 = vsub.s32 3, %v231
  %v233 = vrot.slane %v208, %v232
  %235 = vbcast.lane.b32.xlu0 %v233, 256
  %v236 = vpop.permute.xlu0 %235
  %v237 = vsub.f32 %v132, %v215
  %v238 = vsub.f32 %v132, %v222
  %v239 = vsub.f32 %v132, %v229
  %v240 = vsub.f32 %v132, %v236
  %v241 = vld [vmem:[%s89] sm:$0xf]
  %v242 = vld [vmem:[%s89 + $0x4] sm:$0xf]
  %v243 = vld [vmem:[%s89 + $0x8] sm:$0xf]
  %v244 = vld [vmem:[%s89 + $0xc] sm:$0xf]
  %v245 = vld [vmem:[%s89 + $0x10] sm:$0xf]
  %v246 = vld [vmem:[%s89 + $0x14] sm:$0xf]
  %v247 = vld [vmem:[%s89 + $0x18] sm:$0xf]
  %v248 = vld [vmem:[%s89 + $0x1c] sm:$0xf]
  %v249 = vld [vmem:[%s89 + $0x20] sm:$0xf]
  %v250 = vld [vmem:[%s89 + $0x24] sm:$0xf]
  %v251 = vld [vmem:[%s89 + $0x28] sm:$0xf]
  %v252 = vld [vmem:[%s89 + $0x2c] sm:$0xf]
  %v253 = vld [vmem:[%s89 + $0x30] sm:$0xf]
  %v254 = vld [vmem:[%s89 + $0x34] sm:$0xf]
  %v255 = vld [vmem:[%s89 + $0x38] sm:$0xf]
  %v256 = vld [vmem:[%s89 + $0x3c] sm:$0xf]
  %v257 = vunpack.c.l.bf16 %v241
  %v258 = vunpack.c.l.bf16 %v242
  %v259 = vunpack.c.l.bf16 %v243
  %v260 = vunpack.c.l.bf16 %v244
  %v261 = vunpack.c.l.bf16 %v245
  %v262 = vunpack.c.l.bf16 %v246
  %v263 = vunpack.c.l.bf16 %v247
  %v264 = vunpack.c.l.bf16 %v248
  %v265 = vunpack.c.l.bf16 %v249
  %v266 = vunpack.c.l.bf16 %v250
  %v267 = vunpack.c.l.bf16 %v251
  %v268 = vunpack.c.l.bf16 %v252
  %v269 = vunpack.c.l.bf16 %v253
  %v270 = vunpack.c.l.bf16 %v254
  %v271 = vunpack.c.l.bf16 %v255
  %v272 = vunpack.c.l.bf16 %v256
  %273 = vxpose.xlu0.b32.start [1/16] %v257, 128
  %274 = vxpose.xlu0.b32.cont [2/16] %v258, 128
  %275 = vxpose.xlu0.b32.cont [3/16] %v259, 128
  %276 = vxpose.xlu0.b32.cont [4/16] %v260, 128
  %277 = vxpose.xlu0.b32.cont [5/16] %v261, 128
  %278 = vxpose.xlu0.b32.cont [6/16] %v262, 128
  %279 = vxpose.xlu0.b32.cont [7/16] %v263, 128
  %280 = vxpose.xlu0.b32.cont [8/16] %v264, 128
  %281 = vxpose.xlu0.b32.cont [9/16] %v265, 128
  %282 = vxpose.xlu0.b32.cont [10/16] %v266, 128
  %283 = vxpose.xlu0.b32.cont [11/16] %v267, 128
  %284 = vxpose.xlu0.b32.cont [12/16] %v268, 128
  %285 = vxpose.xlu0.b32.cont [13/16] %v269, 128
  %286 = vxpose.xlu0.b32.cont [14/16] %v270, 128
  %287 = vxpose.xlu0.b32.cont [15/16] %v271, 128
  %288 = vxpose.xlu0.b32.end [16/16] %v272, 128
  %v289 = vpop.trf.xlu0
  %v290 = vpop.trf.xlu0
  %v291 = vpop.trf.xlu0
  %v292 = vpop.trf.xlu0
  %v293 = vpop.trf.xlu0
  %v294 = vpop.trf.xlu0
  %v295 = vpop.trf.xlu0
  %v296 = vpop.trf.xlu0
  %v297 = vpop.trf.xlu0
  %v298 = vpop.trf.xlu0
  %v299 = vpop.trf.xlu0
  %v300 = vpop.trf.xlu0
  %v301 = vpop.trf.xlu0
  %v302 = vpop.trf.xlu0
  %v303 = vpop.trf.xlu0
  %v304 = vpop.trf.xlu0
  %v307 = vcombine.high %v289, %v289
  %v308 = vcombine.high %v290, %v290
  %v311 = vld [vmem:[%s97] sm:$0xf]
  %v312 = vld [vmem:[%s97 + $0x4] sm:$0xf]
  %v313 = vld [vmem:[%s97 + $0x8] sm:$0xf]
  %v314 = vld [vmem:[%s97 + $0xc] sm:$0xf]
  %v315 = vld [vmem:[%s97 + $0x10] sm:$0xf]
  %v316 = vld [vmem:[%s97 + $0x14] sm:$0xf]
  %v317 = vld [vmem:[%s97 + $0x18] sm:$0xf]
  %v318 = vld [vmem:[%s97 + $0x1c] sm:$0xf]
  %v319 = vld [vmem:[%s97 + $0x20] sm:$0xf]
  %v320 = vld [vmem:[%s97 + $0x24] sm:$0xf]
  %v321 = vld [vmem:[%s97 + $0x28] sm:$0xf]
  %v322 = vld [vmem:[%s97 + $0x2c] sm:$0xf]
  %v323 = vld [vmem:[%s97 + $0x30] sm:$0xf]
  %v324 = vld [vmem:[%s97 + $0x34] sm:$0xf]
  %v325 = vld [vmem:[%s97 + $0x38] sm:$0xf]
  %v326 = vld [vmem:[%s97 + $0x3c] sm:$0xf]
  %v327 = vunpack.c.l.bf16 %v311
  %v328 = vunpack.c.l.bf16 %v312
  %v329 = vunpack.c.l.bf16 %v313
  %v330 = vunpack.c.l.bf16 %v314
  %v331 = vunpack.c.l.bf16 %v315
  %v332 = vunpack.c.l.bf16 %v316
  %v333 = vunpack.c.l.bf16 %v317
  %v334 = vunpack.c.l.bf16 %v318
  %v335 = vunpack.c.l.bf16 %v319
  %v336 = vunpack.c.l.bf16 %v320
  %v337 = vunpack.c.l.bf16 %v321
  %v338 = vunpack.c.l.bf16 %v322
  %v339 = vunpack.c.l.bf16 %v323
  %v340 = vunpack.c.l.bf16 %v324
  %v341 = vunpack.c.l.bf16 %v325
  %v342 = vunpack.c.l.bf16 %v326
  %343 = vxpose.xlu0.b32.start [1/16] %v327, 128
  %344 = vxpose.xlu0.b32.cont [2/16] %v328, 128
  %345 = vxpose.xlu0.b32.cont [3/16] %v329, 128
  %346 = vxpose.xlu0.b32.cont [4/16] %v330, 128
  %347 = vxpose.xlu0.b32.cont [5/16] %v331, 128
  %348 = vxpose.xlu0.b32.cont [6/16] %v332, 128
  %349 = vxpose.xlu0.b32.cont [7/16] %v333, 128
  %350 = vxpose.xlu0.b32.cont [8/16] %v334, 128
  %351 = vxpose.xlu0.b32.cont [9/16] %v335, 128
  %352 = vxpose.xlu0.b32.cont [10/16] %v336, 128
  %353 = vxpose.xlu0.b32.cont [11/16] %v337, 128
  %354 = vxpose.xlu0.b32.cont [12/16] %v338, 128
  %355 = vxpose.xlu0.b32.cont [13/16] %v339, 128
  %356 = vxpose.xlu0.b32.cont [14/16] %v340, 128
  %357 = vxpose.xlu0.b32.cont [15/16] %v341, 128
  %358 = vxpose.xlu0.b32.end [16/16] %v342, 128
  %v359 = vpop.trf.xlu0
  %v360 = vpop.trf.xlu0
  %v361 = vpop.trf.xlu0
  %v362 = vpop.trf.xlu0
  %v363 = vpop.trf.xlu0
  %v364 = vpop.trf.xlu0
  %v365 = vpop.trf.xlu0
  %v366 = vpop.trf.xlu0
  %v367 = vpop.trf.xlu0
  %v368 = vpop.trf.xlu0
  %v369 = vpop.trf.xlu0
  %v370 = vpop.trf.xlu0
  %v371 = vpop.trf.xlu0
  %v372 = vpop.trf.xlu0
  %v373 = vpop.trf.xlu0
  %v374 = vpop.trf.xlu0
  %v377 = vcombine.high %v359, %v359
  %v378 = vcombine.high %v360, %v360
  %v381 = vmul.f32 %v289, %v237
  %v382 = vmul.f32 %v307, %v238
  %v383 = vmul.f32 %v290, %v239
  %v384 = vmul.f32 %v308, %v240
  %v385 = vsel %vm109, %v381, 0.0
  %v386 = vrot.slane %v385, 4
  %v387 = vadd.f32 %v385, %v386
  %v388 = vrot.slane %v387, 2
  %v389 = vadd.f32 %v387, %v388
  %v390 = vrot.slane %v389, 1
  %v391 = vadd.f32 %v389, %v390
  %v392 = vsel %vm109, %v382, 0.0
  %v393 = vrot.slane %v392, 4
  %v394 = vadd.f32 %v392, %v393
  %v395 = vrot.slane %v394, 2
  %v396 = vadd.f32 %v394, %v395
  %v397 = vrot.slane %v396, 1
  %v398 = vadd.f32 %v396, %v397
  %v399 = vsel %vm109, %v383, 0.0
  %v400 = vrot.slane %v399, 4
  %v401 = vadd.f32 %v399, %v400
  %v402 = vrot.slane %v401, 2
  %v403 = vadd.f32 %v401, %v402
  %v404 = vrot.slane %v403, 1
  %v405 = vadd.f32 %v403, %v404
  %v406 = vsel %vm109, %v384, 0.0
  %v407 = vrot.slane %v406, 4
  %v408 = vadd.f32 %v406, %v407
  %v409 = vrot.slane %v408, 2
  %v410 = vadd.f32 %v408, %v409
  %v411 = vrot.slane %v410, 1
  %v412 = vadd.f32 %v410, %v411
  %v413 = vmul.f32 %v359, %v237
  %v414 = vmul.f32 %v377, %v238
  %v415 = vmul.f32 %v360, %v239
  %v416 = vmul.f32 %v378, %v240
  %v417 = vsel %vm109, %v413, 0.0
  %v418 = vrot.slane %v417, 4
  %v419 = vadd.f32 %v417, %v418
  %v420 = vrot.slane %v419, 2
  %v421 = vadd.f32 %v419, %v420
  %v422 = vrot.slane %v421, 1
  %v423 = vadd.f32 %v421, %v422
  %v424 = vsel %vm109, %v414, 0.0
  %v425 = vrot.slane %v424, 4
  %v426 = vadd.f32 %v424, %v425
  %v427 = vrot.slane %v426, 2
  %v428 = vadd.f32 %v426, %v427
  %v429 = vrot.slane %v428, 1
  %v430 = vadd.f32 %v428, %v429
  %v431 = vsel %vm109, %v415, 0.0
  %v432 = vrot.slane %v431, 4
  %v433 = vadd.f32 %v431, %v432
  %v434 = vrot.slane %v433, 2
  %v435 = vadd.f32 %v433, %v434
  %v436 = vrot.slane %v435, 1
  %v437 = vadd.f32 %v435, %v436
  %v438 = vsel %vm109, %v416, 0.0
  %v439 = vrot.slane %v438, 4
  %v440 = vadd.f32 %v438, %v439
  %v441 = vrot.slane %v440, 2
  %v442 = vadd.f32 %v440, %v441
  %v443 = vrot.slane %v442, 1
  %v444 = vadd.f32 %v442, %v443
  %vm449 = vcmask 1041409
  %v450 = vsel %vm449, %v398, %v391
  %vm451 = vcmask 1042434
  %v452 = vsel %vm451, %v405, %v450
  %vm453 = vcmask 1043459
  %v454 = vsel %vm453, %v412, %v452
  %v456 = vmul.f32 %v133, %v454
  %v457 = vsel %vm109, %v456, 0.0
  %458 = vadd.xlane.f32.xlu0 %v457
  %v459 = vpop.xlane.xlu0 %458
  %vm464 = vcmask 1045509
  %v465 = vsel %vm464, %v430, %v423
  %vm466 = vcmask 1046534
  %v467 = vsel %vm466, %v437, %v465
  %vm468 = vcmask 1047559
  %v469 = vsel %vm468, %v444, %v467
  %v471 = vmul.f32 %v133, %v469
  %vm472 = vcmask 1047556
  %v473 = vsel %vm472, %v471, 0.0
  %474 = vadd.xlane.f32.xlu0 %v473
  %v475 = vpop.xlane.xlu0 %474
  %v476 = vld [vmem:[%s6] sm:$0xff]
  %v477 = vsel %vm109, %v459, %v475
  %v478 = vadd.f32 %v476, %v477
  %vm479 = vcmask 7168
  %480 = vst.msk [vmem:[%s6] sm:$0xff] %vm479, %v478
  // Predicated region
  $region26: #{cross_entropy_stable_cal_multiple.1} parent=0 // pred_check
    _
  $region27: #{cross_entropy_stable_cal_multiple.1} parent=0 // pred_check_branch
    %482 = sbr.rel (0) target = $region29
  $region28: #{cross_entropy_stable_cal_multiple.1} parent=0 // pred_region
    _
  $region29: #{cross_entropy_stable_cal_multiple.1} parent=0 // pred_fallthru
    _
  // Predicated region
  $region30: #{cross_entropy_stable_cal_multiple.1} parent=0 // pred_check
    _
  $region31: #{cross_entropy_stable_cal_multiple.1} parent=0 // pred_check_branch
    %484 = sbr.rel (0) target = $region33
  $region32: #{cross_entropy_stable_cal_multiple.1} parent=0 // pred_region
    _
  $region33: #{cross_entropy_stable_cal_multiple.1} parent=0 // pred_fallthru
    _
  // Predicated region
  $region34: #{cross_entropy_stable_cal_multiple.1} parent=0 // pred_check
    _
  $region35: #{cross_entropy_stable_cal_multiple.1} parent=0 // pred_check_branch
    %486 = sbr.rel (0) target = $region37
  $region36: #{cross_entropy_stable_cal_multiple.1} parent=0 // pred_region
    _
  $region37: #{cross_entropy_stable_cal_multiple.1} parent=0 // pred_fallthru
    _
  // Predicated region
  $region38: #{cross_entropy_stable_cal_multiple.1} parent=0 // pred_check
    _
  $region39: #{cross_entropy_stable_cal_multiple.1} parent=0 // pred_check_branch
    %488 = sbr.rel (0) target = $region41
  $region40: #{cross_entropy_stable_cal_multiple.1} parent=0 // pred_region
    _
  $region41: #{cross_entropy_stable_cal_multiple.1} parent=0 // pred_fallthru
    _

</llo_original>
